<compile_context>
chip_gen: v5e
topology: v5e:2x2
jax: 0.10.0
libtpu: 0.0.40
codegen_flags: <defaults>
</compile_context>

<pallas_src>
import jax
import jax.numpy as jnp
from jax import lax
from jax.experimental import pallas as pl
from jax.experimental.pallas import tpu as pltpu

LANE = 128   # vreg lane width
SUB = 8      # vreg sublane count

H1, H2 = 24, 32  # hidden widths of the original module


def _round_up(n, m):
    return (n + m - 1) // m * m


# ----------------------------------------------------------------------------
# Kernel
# ----------------------------------------------------------------------------
def dqn_kernel(x_ref, w1t_ref, b1_ref, w2_ref, b2_ref, w3_ref, b3_ref, o_ref):
    x = x_ref[...]                                      # (tm, Dp)

    # fc1: contract over D (lane dim of both operands). w1t is (H1p, Dp).
    h1 = lax.dot_general(
        x, w1t_ref[...],
        dimension_numbers=(((1,), (1,)), ((), ())),
        preferred_element_type=jnp.float32,
    )                                                   # (tm, H1p) f32
    h1 = jnp.maximum(h1 + b1_ref[...], 0.0)             # bias/ReLU in f32

    # fc2: (tm, H1p) @ (H1p, H2p)
    h2 = jnp.dot(h1.astype(w2_ref.dtype), w2_ref[...],
                 preferred_element_type=jnp.float32)
    h2 = jnp.maximum(h2 + b2_ref[...], 0.0)

    # out: (tm, H2p) @ (H2p, Ap)
    q = jnp.dot(h2.astype(w3_ref.dtype), w3_ref[...],
                preferred_element_type=jnp.float32)
    o_ref[...] = (q + b3_ref[...]).astype(o_ref.dtype)


# ----------------------------------------------------------------------------
# Parameter preparation (pad / transpose into kernel layout, done once)
# ----------------------------------------------------------------------------
def prepare_params(params, d_in, mxu_dtype=jnp.float32):
    """Pad & transpose torch-layout params into lane-dense kernel layout.

    params: dict with w1 (D,24), b1 (1,24), w2 (24,32), b2 (1,32),
            w3 (32,A), b3 (1,A), all float32 (weights already (in, out)).
    """
    Dp = _round_up(d_in, LANE)
    H1p = _round_up(H1, LANE)
    H2p = _round_up(H2, LANE)
    A = params["w3"].shape[1]
    Ap = _round_up(A, LANE)

    # fc1 weight stored transposed: (H1p, Dp), zero-padded.
    w1t = jnp.zeros((H1p, Dp), mxu_dtype).at[:H1, :d_in].set(
        params["w1"].T.astype(mxu_dtype))
    b1 = jnp.zeros((1, H1p), jnp.float32).at[:, :H1].set(params["b1"])

    w2 = jnp.zeros((H1p, H2p), mxu_dtype).at[:H1, :H2].set(
        params["w2"].astype(mxu_dtype))
    b2 = jnp.zeros((1, H2p), jnp.float32).at[:, :H2].set(params["b2"])

    w3 = jnp.zeros((H2p, Ap), mxu_dtype).at[:H2, :A].set(
        params["w3"].astype(mxu_dtype))
    b3 = jnp.zeros((1, Ap), jnp.float32).at[:, :A].set(params["b3"])

    return dict(w1t=w1t, b1=b1, w2=w2, b2=b2, w3=w3, b3=b3,
                d_in=d_in, num_actions=A)


# ----------------------------------------------------------------------------
# Forward wrapper
# ----------------------------------------------------------------------------
def deep_q_network_forward(x_nchw, kparams, *, tile_m=1024):
    """x_nchw: (B, 3, H, W) float32. kparams: output of prepare_params."""
    B = x_nchw.shape[0]
    x = x_nchw.reshape(B, -1)          # channel-major flatten == torch.flatten(1)
    D = kparams["d_in"]
    assert x.shape[1] == D

    w1t, b1 = kparams["w1t"], kparams["b1"]
    w2, b2 = kparams["w2"], kparams["b2"]
    w3, b3 = kparams["w3"], kparams["b3"]
    mxu_dtype = w1t.dtype
    Dp = w1t.shape[1]
    A = kparams["num_actions"]
    Ap = b3.shape[1]

    # Batch tile: multiple of 8 sublanes, capped by tile_m (tune per generation:
    # <=~2048 for v7x's 64 MiB VMEM; larger OK on v5e/v6e).
    tm = _round_up(max(SUB, min(tile_m, _round_up(B, SUB))), SUB)
    Bp = _round_up(B, tm)

    # Pad input to (Bp, Dp) with zeros (zero rows / zero D-padding are inert).
    xp = jnp.pad(x.astype(mxu_dtype), ((0, Bp - B), (0, Dp - D)))

    itemsize = lambda a: jnp.dtype(a.dtype).itemsize
    weight_bytes = sum(a.size * itemsize(a) for a in (w1t, b1, w2, b2, w3, b3))
    cost = pl.CostEstimate(
        flops=2 * Bp * (Dp * w1t.shape[0] + w2.shape[0] * w2.shape[1]
                        + w3.shape[0] * w3.shape[1]),
        transcendentals=0,
        bytes_accessed=xp.size * itemsize(xp) + weight_bytes + Bp * Ap * 4,
    )

    const = lambda shape: pl.BlockSpec(shape, lambda i: (0, 0))
    out_padded = pl.pallas_call(
        dqn_kernel,
        out_shape=jax.ShapeDtypeStruct((Bp, Ap), jnp.float32),
        grid=(Bp // tm,),
        in_specs=[
            pl.BlockSpec((tm, Dp), lambda i: (i, 0)),   # x: one tile per step
            const(w1t.shape), const(b1.shape),          # weights stay resident
            const(w2.shape), const(b2.shape),
            const(w3.shape), const(b3.shape),
        ],
        out_specs=pl.BlockSpec((tm, Ap), lambda i: (i, 0)),
        compiler_params=pltpu.CompilerParams(
            dimension_semantics=("parallel",)),          # v7x 2-TC sharding
        cost_estimate=cost,
    )(xp, w1t, b1, w2, b2, w3, b3)

    return out_padded[:B, :A]


# ----------------------------------------------------------------------------
# Init (mimics torch.nn.Linear default U[-1/sqrt(fan_in), 1/sqrt(fan_in)]);
# weights stored as (in, out) relative to torch's (out, in).
# ----------------------------------------------------------------------------
def init_params(key, img_height, img_width, num_actions=2):
    d_in = img_height * img_width * 3
    dims = [(d_in, H1), (H1, H2), (H2, num_actions)]
    params = {}
    for i, (fi, fo) in enumerate(dims, start=1):
        key, kw, kb = jax.random.split(key, 3)
        bound = 1.0 / (fi ** 0.5)
        params[f"w{i}"] = jax.random.uniform(kw, (fi, fo), jnp.float32, -bound, bound)
        params[f"b{i}"] = jax.random.uniform(kb, (1, fo), jnp.float32, -bound, bound)
    return params


def reference_forward(x_nchw, params):
    x = x_nchw.reshape(x_nchw.shape[0], -1)
    h1 = jnp.maximum(x @ params["w1"] + params["b1"], 0.0)
    h2 = jnp.maximum(h1 @ params["w2"] + params["b2"], 0.0)
    return h2 @ params["w3"] + params["b3"]


if __name__ == "__main__":
    key = jax.random.PRNGKey(0)
    B, H, W, num_actions = 2, 16, 16, 2

    key, kx, kp = jax.random.split(key, 3)
    x = jax.random.normal(kx, (B, 3, H, W), jnp.float32)   # NCHW like PyTorch
    params = init_params(kp, H, W, num_actions)

    # f32 MXU operands by default for exact parity with the torch module;
    # pass mxu_dtype=jnp.bfloat16 to halve weight/activation DMA bytes.
    kparams = prepare_params(params, 3 * H * W, mxu_dtype=jnp.float32)

    q = deep_q_network_forward(x, kparams)
    q = jax.block_until_ready(q)

    q_ref = reference_forward(x, params)
    assert q.shape == (B, num_actions)
    assert jnp.allclose(q, q_ref, atol=1e-4, rtol=1e-4), float(
        jnp.max(jnp.abs(q - q_ref)))

    print("KERNEL_OK")
</pallas_src>

<mosaic_0001>
module attributes {stable_mosaic.version = 11 : i64} {
  func.func @dqn_kernel(%arg0: i32, %arg1: memref<8x768xf32, #tpu.memory_space<vmem>>, %arg2: memref<128x768xf32, #tpu.memory_space<vmem>>, %arg3: memref<1x128xf32, #tpu.memory_space<vmem>>, %arg4: memref<128x128xf32, #tpu.memory_space<vmem>>, %arg5: memref<1x128xf32, #tpu.memory_space<vmem>>, %arg6: memref<128x128xf32, #tpu.memory_space<vmem>>, %arg7: memref<1x128xf32, #tpu.memory_space<vmem>>, %arg8: memref<8x128xf32, #tpu.memory_space<vmem>>) attributes {dimension_semantics = [#tpu.dimension_semantics<parallel>], iteration_bounds = array<i64: 1>, scalar_prefetch = 0 : i64, scratch_operands = 0 : i64, tpu.core_type = #tpu.core_type<tc>, window_params = [{transform_indices = @transform_0, window_bounds = array<i64: 8, 768>}, {pipeline_mode = #tpu.pipeline_mode<synchronous>, transform_indices = @transform_1, window_bounds = array<i64: 128, 768>}, {pipeline_mode = #tpu.pipeline_mode<synchronous>, transform_indices = @transform_2, window_bounds = array<i64: 1, 128>}, {pipeline_mode = #tpu.pipeline_mode<synchronous>, transform_indices = @transform_3, window_bounds = array<i64: 128, 128>}, {pipeline_mode = #tpu.pipeline_mode<synchronous>, transform_indices = @transform_4, window_bounds = array<i64: 1, 128>}, {pipeline_mode = #tpu.pipeline_mode<synchronous>, transform_indices = @transform_5, window_bounds = array<i64: 128, 128>}, {pipeline_mode = #tpu.pipeline_mode<synchronous>, transform_indices = @transform_6, window_bounds = array<i64: 1, 128>}, {transform_indices = @transform_7, window_bounds = array<i64: 8, 128>}]} {
    %c0 = arith.constant 0 : index
    %c0_0 = arith.constant 0 : index
    %0 = vector.load %arg1[%c0, %c0_0] : memref<8x768xf32, #tpu.memory_space<vmem>>, vector<8x768xf32>
    %c0_1 = arith.constant 0 : index
    %c0_2 = arith.constant 0 : index
    %1 = vector.load %arg2[%c0_1, %c0_2] : memref<128x768xf32, #tpu.memory_space<vmem>>, vector<128x768xf32>
    %cst = arith.constant dense<0.000000e+00> : vector<8x128xf32>
    %2 = tpu.matmul %0, %1, %cst {dimension_numbers = #tpu.dot_dimension_numbers<[1], [1], [0], [0], [0, 0, 1, 0], [], []>} : vector<8x768xf32>, vector<128x768xf32>, vector<8x128xf32> -> vector<8x128xf32>
    %c0_3 = arith.constant 0 : index
    %c0_4 = arith.constant 0 : index
    %3 = vector.load %arg3[%c0_3, %c0_4] : memref<1x128xf32, #tpu.memory_space<vmem>>, vector<1x128xf32>
    %4 = vector.broadcast %3 : vector<1x128xf32> to vector<8x128xf32>
    %5 = arith.addf %2, %4 : vector<8x128xf32>
    %cst_5 = arith.constant 0.000000e+00 : f32
    %6 = vector.broadcast %cst_5 : f32 to vector<8x128xf32>
    %7 = arith.maximumf %5, %6 : vector<8x128xf32>
    %c0_6 = arith.constant 0 : index
    %c0_7 = arith.constant 0 : index
    %8 = vector.load %arg4[%c0_6, %c0_7] : memref<128x128xf32, #tpu.memory_space<vmem>>, vector<128x128xf32>
    %cst_8 = arith.constant dense<0.000000e+00> : vector<8x128xf32>
    %9 = tpu.matmul %7, %8, %cst_8 {dimension_numbers = #tpu.dot_dimension_numbers<[1], [0], [0], [1], [0, 0, 1, 1], [], []>} : vector<8x128xf32>, vector<128x128xf32>, vector<8x128xf32> -> vector<8x128xf32>
    %c0_9 = arith.constant 0 : index
    %c0_10 = arith.constant 0 : index
    %10 = vector.load %arg5[%c0_9, %c0_10] : memref<1x128xf32, #tpu.memory_space<vmem>>, vector<1x128xf32>
    %11 = vector.broadcast %10 : vector<1x128xf32> to vector<8x128xf32>
    %12 = arith.addf %9, %11 : vector<8x128xf32>
    %cst_11 = arith.constant 0.000000e+00 : f32
    %13 = vector.broadcast %cst_11 : f32 to vector<8x128xf32>
    %14 = arith.maximumf %12, %13 : vector<8x128xf32>
    %c0_12 = arith.constant 0 : index
    %c0_13 = arith.constant 0 : index
    %15 = vector.load %arg6[%c0_12, %c0_13] : memref<128x128xf32, #tpu.memory_space<vmem>>, vector<128x128xf32>
    %cst_14 = arith.constant dense<0.000000e+00> : vector<8x128xf32>
    %16 = tpu.matmul %14, %15, %cst_14 {dimension_numbers = #tpu.dot_dimension_numbers<[1], [0], [0], [1], [0, 0, 1, 1], [], []>} : vector<8x128xf32>, vector<128x128xf32>, vector<8x128xf32> -> vector<8x128xf32>
    %c0_15 = arith.constant 0 : index
    %c0_16 = arith.constant 0 : index
    %17 = vector.load %arg7[%c0_15, %c0_16] : memref<1x128xf32, #tpu.memory_space<vmem>>, vector<1x128xf32>
    %18 = vector.broadcast %17 : vector<1x128xf32> to vector<8x128xf32>
    %19 = arith.addf %16, %18 : vector<8x128xf32>
    %c0_17 = arith.constant 0 : index
    %c0_18 = arith.constant 0 : index
    %20 = vector.load %arg8[%c0_17, %c0_18] : memref<8x128xf32, #tpu.memory_space<vmem>>, vector<8x128xf32>
    tpu.vector_store %arg8[%c0_17, %c0_18], %19 {strides = array<i32>} : memref<8x128xf32, #tpu.memory_space<vmem>>, vector<8x128xf32>,
    return
  }
  func.func @transform_0(%arg0: i32) -> (i32, i32) {
    %c0_i32 = arith.constant 0 : i32
    %c0_i32_0 = arith.constant 0 : i32
    return %arg0, %c0_i32 : i32, i32
  }
  func.func @transform_1(%arg0: i32) -> (i32, i32) {
    %c0_i32 = arith.constant 0 : i32
    %c0_i32_0 = arith.constant 0 : i32
    %c0_i32_1 = arith.constant 0 : i32
    return %c0_i32, %c0_i32_0 : i32, i32
  }
  func.func @transform_2(%arg0: i32) -> (i32, i32) {
    %c0_i32 = arith.constant 0 : i32
    %c0_i32_0 = arith.constant 0 : i32
    %c0_i32_1 = arith.constant 0 : i32
    return %c0_i32, %c0_i32_0 : i32, i32
  }
  func.func @transform_3(%arg0: i32) -> (i32, i32) {
    %c0_i32 = arith.constant 0 : i32
    %c0_i32_0 = arith.constant 0 : i32
    %c0_i32_1 = arith.constant 0 : i32
    return %c0_i32, %c0_i32_0 : i32, i32
  }
  func.func @transform_4(%arg0: i32) -> (i32, i32) {
    %c0_i32 = arith.constant 0 : i32
    %c0_i32_0 = arith.constant 0 : i32
    %c0_i32_1 = arith.constant 0 : i32
    return %c0_i32, %c0_i32_0 : i32, i32
  }
  func.func @transform_5(%arg0: i32) -> (i32, i32) {
    %c0_i32 = arith.constant 0 : i32
    %c0_i32_0 = arith.constant 0 : i32
    %c0_i32_1 = arith.constant 0 : i32
    return %c0_i32, %c0_i32_0 : i32, i32
  }
  func.func @transform_6(%arg0: i32) -> (i32, i32) {
    %c0_i32 = arith.constant 0 : i32
    %c0_i32_0 = arith.constant 0 : i32
    %c0_i32_1 = arith.constant 0 : i32
    return %c0_i32, %c0_i32_0 : i32, i32
  }
  func.func @transform_7(%arg0: i32) -> (i32, i32) {
    %c0_i32 = arith.constant 0 : i32
    %c0_i32_0 = arith.constant 0 : i32
    return %arg0, %c0_i32 : i32, i32
  }
}

</mosaic_0001>

<llo_original>
// kernel: tpu_custom_call.1
$region0: #{tpu_custom_call.1}
  #allocation0 [shape = 'u32[]', space=smem, size = 0x4, offset = 0x4, fixed_abs, tag = 'smem constant byte address 0x4 - core index']
  #allocation1 [shape = 'u32[72,128]{1,0:T(1,128)}', space=vmem, size = 0x9000, scoped, tag = 'internal scratch']
  %s0 = inlined_call_operand.hbm [shape: f32[8,768], index: 0, kind: input, shape index: {}]
  %s1 = inlined_call_operand.hbm [shape: f32[128,768], index: 1, kind: input, shape index: {}]
  %s2 = inlined_call_operand.vmem [shape: f32[1,128], index: 2, kind: input, shape index: {}]
  %s3 = inlined_call_operand.hbm [shape: f32[128,128], index: 3, kind: input, shape index: {}]
  %s4 = inlined_call_operand.vmem [shape: f32[1,128], index: 4, kind: input, shape index: {}]
  %s5 = inlined_call_operand.hbm [shape: f32[128,128], index: 5, kind: input, shape index: {}]
  %s6 = inlined_call_operand.vmem [shape: f32[1,128], index: 6, kind: input, shape index: {}]
  %s7 = inlined_call_operand.hbm [shape: f32[8,128], index: 7, kind: output, shape index: {}]
  %s8 = sld [smem:[#allocation0]]
  $region54: #{tpu_custom_call.1} parent=0
    _
  %s10 = ssub.s32 1, %s8
  %s11 = scalar_select 0, %s10, %s8
  $region1: #{tpu_custom_call.1} parent=0
    #allocation2 [shape = 'u8[24576]{0}', space=vmem, size = 0x6000, scoped, tag = 'input window, operand 0, single buffered']
    #allocation3 [shape = 's32[1]{0}', space=sflag, size = 0x4, scoped, tag = 'scoped memory for tpu_custom_call.1']
    #allocation4 [shape = 's32[1]{0}', space=sflag, size = 0x4, scoped, tag = 'scoped memory for tpu_custom_call.1']
    #allocation5 [shape = 'u8[393216]{0}', space=vmem, size = 0x60000, scoped, tag = 'input window, operand 1, single buffered']
    #allocation6 [shape = 's32[1]{0}', space=sflag, size = 0x4, scoped, tag = 'scoped memory for tpu_custom_call.1']
    #allocation7 [shape = 'u8[65536]{0}', space=vmem, size = 0x10000, scoped, tag = 'input window, operand 3, single buffered']
    #allocation8 [shape = 'u8[65536]{0}', space=vmem, size = 0x10000, scoped, tag = 'input window, operand 5, single buffered']
    #allocation9 [shape = 's32[1]{0}', space=sflag, size = 0x4, scoped, tag = 'scoped memory for tpu_custom_call.1']
    #allocation10 [shape = 'u8[4096]{0}', space=vmem, size = 0x1000, scoped, tag = 'output window, operand 0, single buffered']
    %12 = vsyncpa [#allocation3], 0
    %13 = vsyncpa [#allocation6], 0
    %14 = vsyncpa [#allocation9], 0
    %15 = vsyncpa [#allocation4], 0
    // Predicated region
    $region2: #{tpu_custom_call.1} parent=1 // pred_check
      _
    $region3: #{tpu_custom_call.1} parent=1 // pred_check_branch
      %17 = sbr.rel (0) target = $region5
    $region4: #{tpu_custom_call.1} parent=1 // pred_region
      %19 = vsyncadd [#allocation3], 0
      %s21 = sshll.u32 %s0, 4
      %s22 = int_to_ptr.hbm [resolvable:$true] %s21
      %s23 = sshll.u32 [#allocation2], 4
      %s24 = int_to_ptr.vmem [resolvable:$true] %s23
      %26 = dma.hbm_to_vmem [thread:$0]  %s22, 768, %s24, [#allocation3]
    $region5: #{tpu_custom_call.1} parent=1 // pred_fallthru
      _
    // Predicated region
    $region6: #{tpu_custom_call.1} parent=1 // pred_check
      _
    $region7: #{tpu_custom_call.1} parent=1 // pred_check_branch
      %28 = sbr.rel (0) target = $region9
    $region8: #{tpu_custom_call.1} parent=1 // pred_region
      %30 = vsyncadd [#allocation6], 0
      %s31 = sshll.u32 %s1, 4
      %s32 = int_to_ptr.hbm [resolvable:$true] %s31
      %s33 = sshll.u32 [#allocation5], 4
      %s34 = int_to_ptr.vmem [resolvable:$true] %s33
      %39 = dma.hbm_to_vmem [thread:$0]  %s32, 12288, %s34, [#allocation6], 768, 768, 48
    $region9: #{tpu_custom_call.1} parent=1 // pred_fallthru
      _
    // Predicated region
    $region10: #{tpu_custom_call.1} parent=1 // pred_check
      _
    $region11: #{tpu_custom_call.1} parent=1 // pred_check_branch
      %41 = sbr.rel (0) target = $region13
    $region12: #{tpu_custom_call.1} parent=1 // pred_region
      _
    $region13: #{tpu_custom_call.1} parent=1 // pred_fallthru
      _
    // Predicated region
    $region14: #{tpu_custom_call.1} parent=1 // pred_check
      _
    $region15: #{tpu_custom_call.1} parent=1 // pred_check_branch
      %43 = sbr.rel (0) target = $region17
    $region16: #{tpu_custom_call.1} parent=1 // pred_region
      %45 = vsyncadd [#allocation6], 0
      %s46 = sshll.u32 %s3, 4
      %s47 = int_to_ptr.hbm [resolvable:$true] %s46
      %s48 = sshll.u32 [#allocation7], 4
      %s49 = int_to_ptr.vmem [resolvable:$true] %s48
      %54 = dma.hbm_to_vmem [thread:$0]  %s47, 2048, %s49, [#allocation6], 128, 128, 8
    $region17: #{tpu_custom_call.1} parent=1 // pred_fallthru
      _
    // Predicated region
    $region18: #{tpu_custom_call.1} parent=1 // pred_check
      _
    $region19: #{tpu_custom_call.1} parent=1 // pred_check_branch
      %56 = sbr.rel (0) target = $region21
    $region20: #{tpu_custom_call.1} parent=1 // pred_region
      _
    $region21: #{tpu_custom_call.1} parent=1 // pred_fallthru
      _
    // Predicated region
    $region22: #{tpu_custom_call.1} parent=1 // pred_check
      _
    $region23: #{tpu_custom_call.1} parent=1 // pred_check_branch
      %58 = sbr.rel (0) target = $region25
    $region24: #{tpu_custom_call.1} parent=1 // pred_region
      %60 = vsyncadd [#allocation9], 0
      %s61 = sshll.u32 %s5, 4
      %s62 = int_to_ptr.hbm [resolvable:$true] %s61
      %s63 = sshll.u32 [#allocation8], 4
      %s64 = int_to_ptr.vmem [resolvable:$true] %s63
      %69 = dma.hbm_to_vmem [thread:$0]  %s62, 2048, %s64, [#allocation9], 128, 128, 8
    $region25: #{tpu_custom_call.1} parent=1 // pred_fallthru
      _
    // Predicated region
    $region26: #{tpu_custom_call.1} parent=1 // pred_check
      _
    $region27: #{tpu_custom_call.1} parent=1 // pred_check_branch
      %71 = sbr.rel (0) target = $region29
    $region28: #{tpu_custom_call.1} parent=1 // pred_region
      _
    $region29: #{tpu_custom_call.1} parent=1 // pred_fallthru
      _
    // Predicated region
    $region30: #{tpu_custom_call.1} parent=1 // pred_check
      _
    $region31: #{tpu_custom_call.1} parent=1 // pred_check_branch
      %73 = sbr.rel (0) target = $region33
    $region32: #{tpu_custom_call.1} parent=1 // pred_region
      %75 = dma.done [#allocation3], 768
    $region33: #{tpu_custom_call.1} parent=1 // pred_fallthru
      _
    // Predicated region
    $region34: #{tpu_custom_call.1} parent=1 // pred_check
      _
    $region35: #{tpu_custom_call.1} parent=1 // pred_check_branch
      %77 = sbr.rel (0) target = $region37
    $region36: #{tpu_custom_call.1} parent=1 // pred_region
      %79 = dma.done [#allocation6], 12288
    $region37: #{tpu_custom_call.1} parent=1 // pred_fallthru
      _
    // Predicated region
    $region38: #{tpu_custom_call.1} parent=1 // pred_check
      _
    $region39: #{tpu_custom_call.1} parent=1 // pred_check_branch
      %81 = sbr.rel (0) target = $region41
    $region40: #{tpu_custom_call.1} parent=1 // pred_region
      %83 = dma.done [#allocation6], 2048
    $region41: #{tpu_custom_call.1} parent=1 // pred_fallthru
      _
    // Predicated region
    $region42: #{tpu_custom_call.1} parent=1 // pred_check
      _
    $region43: #{tpu_custom_call.1} parent=1 // pred_check_branch
      %85 = sbr.rel (0) target = $region45
    $region44: #{tpu_custom_call.1} parent=1 // pred_region
      %87 = dma.done [#allocation9], 2048
    $region45: #{tpu_custom_call.1} parent=1 // pred_fallthru
      _
    %v88 = vld [vmem:[#allocation2] sm:$0xff]
    %v89 = vld [vmem:[#allocation2 + $0x8] sm:$0xff]
    %v90 = vld [vmem:[#allocation2 + $0x10] sm:$0xff]
    %v91 = vld [vmem:[#allocation2 + $0x18] sm:$0xff]
    %v92 = vld [vmem:[#allocation2 + $0x20] sm:$0xff]
    %v93 = vld [vmem:[#allocation2 + $0x28] sm:$0xff]
    %v94 = vld [vmem:[#allocation5] sm:$0xff]
    %v95 = vld [vmem:[#allocation5 + $0x8] sm:$0xff]
    %v96 = vld [vmem:[#allocation5 + $0x10] sm:$0xff]
    %v97 = vld [vmem:[#allocation5 + $0x18] sm:$0xff]
    %v98 = vld [vmem:[#allocation5 + $0x20] sm:$0xff]
    %v99 = vld [vmem:[#allocation5 + $0x28] sm:$0xff]
    %v100 = vld [vmem:[#allocation5 + $0x30] sm:$0xff]
    %v101 = vld [vmem:[#allocation5 + $0x38] sm:$0xff]
    %v102 = vld [vmem:[#allocation5 + $0x40] sm:$0xff]
    %v103 = vld [vmem:[#allocation5 + $0x48] sm:$0xff]
    %v104 = vld [vmem:[#allocation5 + $0x50] sm:$0xff]
    %v105 = vld [vmem:[#allocation5 + $0x58] sm:$0xff]
    %v106 = vld [vmem:[#allocation5 + $0x60] sm:$0xff]
    %v107 = vld [vmem:[#allocation5 + $0x68] sm:$0xff]
    %v108 = vld [vmem:[#allocation5 + $0x70] sm:$0xff]
    %v109 = vld [vmem:[#allocation5 + $0x78] sm:$0xff]
    %v110 = vld [vmem:[#allocation5 + $0x80] sm:$0xff]
    %v111 = vld [vmem:[#allocation5 + $0x88] sm:$0xff]
    %v112 = vld [vmem:[#allocation5 + $0x90] sm:$0xff]
    %v113 = vld [vmem:[#allocation5 + $0x98] sm:$0xff]
    %v114 = vld [vmem:[#allocation5 + $0xa0] sm:$0xff]
    %v115 = vld [vmem:[#allocation5 + $0xa8] sm:$0xff]
    %v116 = vld [vmem:[#allocation5 + $0xb0] sm:$0xff]
    %v117 = vld [vmem:[#allocation5 + $0xb8] sm:$0xff]
    %v118 = vld [vmem:[#allocation5 + $0xc0] sm:$0xff]
    %v119 = vld [vmem:[#allocation5 + $0xc8] sm:$0xff]
    %v120 = vld [vmem:[#allocation5 + $0xd0] sm:$0xff]
    %v121 = vld [vmem:[#allocation5 + $0xd8] sm:$0xff]
    %v122 = vld [vmem:[#allocation5 + $0xe0] sm:$0xff]
    %v123 = vld [vmem:[#allocation5 + $0xe8] sm:$0xff]
    %v124 = vld [vmem:[#allocation5 + $0xf0] sm:$0xff]
    %v125 = vld [vmem:[#allocation5 + $0xf8] sm:$0xff]
    %v126 = vld [vmem:[#allocation5 + $0x100] sm:$0xff]
    %v127 = vld [vmem:[#allocation5 + $0x108] sm:$0xff]
    %v128 = vld [vmem:[#allocation5 + $0x110] sm:$0xff]
    %v129 = vld [vmem:[#allocation5 + $0x118] sm:$0xff]
    %v130 = vld [vmem:[#allocation5 + $0x120] sm:$0xff]
    %v131 = vld [vmem:[#allocation5 + $0x128] sm:$0xff]
    %v132 = vld [vmem:[#allocation5 + $0x130] sm:$0xff]
    %v133 = vld [vmem:[#allocation5 + $0x138] sm:$0xff]
    %v134 = vld [vmem:[#allocation5 + $0x140] sm:$0xff]
    %v135 = vld [vmem:[#allocation5 + $0x148] sm:$0xff]
    %v136 = vld [vmem:[#allocation5 + $0x150] sm:$0xff]
    %v137 = vld [vmem:[#allocation5 + $0x158] sm:$0xff]
    %v138 = vld [vmem:[#allocation5 + $0x160] sm:$0xff]
    %v139 = vld [vmem:[#allocation5 + $0x168] sm:$0xff]
    %v140 = vld [vmem:[#allocation5 + $0x170] sm:$0xff]
    %v141 = vld [vmem:[#allocation5 + $0x178] sm:$0xff]
    %v142 = vld [vmem:[#allocation5 + $0x180] sm:$0xff]
    %v143 = vld [vmem:[#allocation5 + $0x188] sm:$0xff]
    %v144 = vld [vmem:[#allocation5 + $0x190] sm:$0xff]
    %v145 = vld [vmem:[#allocation5 + $0x198] sm:$0xff]
    %v146 = vld [vmem:[#allocation5 + $0x1a0] sm:$0xff]
    %v147 = vld [vmem:[#allocation5 + $0x1a8] sm:$0xff]
    %v148 = vld [vmem:[#allocation5 + $0x1b0] sm:$0xff]
    %v149 = vld [vmem:[#allocation5 + $0x1b8] sm:$0xff]
    %v150 = vld [vmem:[#allocation5 + $0x1c0] sm:$0xff]
    %v151 = vld [vmem:[#allocation5 + $0x1c8] sm:$0xff]
    %v152 = vld [vmem:[#allocation5 + $0x1d0] sm:$0xff]
    %v153 = vld [vmem:[#allocation5 + $0x1d8] sm:$0xff]
    %v154 = vld [vmem:[#allocation5 + $0x1e0] sm:$0xff]
    %v155 = vld [vmem:[#allocation5 + $0x1e8] sm:$0xff]
    %v156 = vld [vmem:[#allocation5 + $0x1f0] sm:$0xff]
    %v157 = vld [vmem:[#allocation5 + $0x1f8] sm:$0xff]
    %v158 = vld [vmem:[#allocation5 + $0x200] sm:$0xff]
    %v159 = vld [vmem:[#allocation5 + $0x208] sm:$0xff]
    %v160 = vld [vmem:[#allocation5 + $0x210] sm:$0xff]
    %v161 = vld [vmem:[#allocation5 + $0x218] sm:$0xff]
    %v162 = vld [vmem:[#allocation5 + $0x220] sm:$0xff]
    %v163 = vld [vmem:[#allocation5 + $0x228] sm:$0xff]
    %v164 = vld [vmem:[#allocation5 + $0x230] sm:$0xff]
    %v165 = vld [vmem:[#allocation5 + $0x238] sm:$0xff]
    %v166 = vld [vmem:[#allocation5 + $0x240] sm:$0xff]
    %v167 = vld [vmem:[#allocation5 + $0x248] sm:$0xff]
    %v168 = vld [vmem:[#allocation5 + $0x250] sm:$0xff]
    %v169 = vld [vmem:[#allocation5 + $0x258] sm:$0xff]
    %v170 = vld [vmem:[#allocation5 + $0x260] sm:$0xff]
    %v171 = vld [vmem:[#allocation5 + $0x268] sm:$0xff]
    %v172 = vld [vmem:[#allocation5 + $0x270] sm:$0xff]
    %v173 = vld [vmem:[#allocation5 + $0x278] sm:$0xff]
    %v174 = vld [vmem:[#allocation5 + $0x280] sm:$0xff]
    %v175 = vld [vmem:[#allocation5 + $0x288] sm:$0xff]
    %v176 = vld [vmem:[#allocation5 + $0x290] sm:$0xff]
    %v177 = vld [vmem:[#allocation5 + $0x298] sm:$0xff]
    %v178 = vld [vmem:[#allocation5 + $0x2a0] sm:$0xff]
    %v179 = vld [vmem:[#allocation5 + $0x2a8] sm:$0xff]
    %v180 = vld [vmem:[#allocation5 + $0x2b0] sm:$0xff]
    %v181 = vld [vmem:[#allocation5 + $0x2b8] sm:$0xff]
    %v182 = vld [vmem:[#allocation5 + $0x2c0] sm:$0xff]
    %v183 = vld [vmem:[#allocation5 + $0x2c8] sm:$0xff]
    %v184 = vld [vmem:[#allocation5 + $0x2d0] sm:$0xff]
    %v185 = vld [vmem:[#allocation5 + $0x2d8] sm:$0xff]
    %v186 = vld [vmem:[#allocation5 + $0x2e0] sm:$0xff]
    %v187 = vld [vmem:[#allocation5 + $0x2e8] sm:$0xff]
    %v188 = vld [vmem:[#allocation5 + $0x2f0] sm:$0xff]
    %v189 = vld [vmem:[#allocation5 + $0x2f8] sm:$0xff]
    %v190 = vld [vmem:[%s2] sm:$0x1]
    %v192 = vperm.slane %v190, 0
    %194 = vmatpush.xpose.msra.mxu0 %v184
    %195 = vmatpush.xpose.msra.mxu0 %v178
    %196 = vmatpush.xpose.msra.mxu0 %v172
    %197 = vmatpush.xpose.msra.mxu0 %v166
    %198 = vmatpush.xpose.msra.mxu0 %v160
    %199 = vmatpush.xpose.msra.mxu0 %v154
    %200 = vmatpush.xpose.msra.mxu0 %v148
    %201 = vmatpush.xpose.msra.mxu0 %v142
    %202 = vmatpush.xpose.msra.mxu0 %v136
    %203 = vmatpush.xpose.msra.mxu0 %v130
    %204 = vmatpush.xpose.msra.mxu0 %v124
    %205 = vmatpush.xpose.msra.mxu0 %v118
    %206 = vmatpush.xpose.msra.mxu0 %v112
    %207 = vmatpush.xpose.msra.mxu0 %v106
    %208 = vmatpush.xpose.msra.mxu0 %v100
    %209 = vmatpush.xpose.msra.mxu0 %v94
    %210 = vmatmul.f32.gmra.mxu0 %v88
    %v211 = vpop.f32.mrf.mxu0
    %v212 = vadd.f32 %v192, %v211
    %213 = vdwg.mxu0
    %214 = vmatpush.xpose.msra.mxu0 %v185
    %215 = vmatpush.xpose.msra.mxu0 %v179
    %216 = vmatpush.xpose.msra.mxu0 %v173
    %217 = vmatpush.xpose.msra.mxu0 %v167
    %218 = vmatpush.xpose.msra.mxu0 %v161
    %219 = vmatpush.xpose.msra.mxu0 %v155
    %220 = vmatpush.xpose.msra.mxu0 %v149
    %221 = vmatpush.xpose.msra.mxu0 %v143
    %222 = vmatpush.xpose.msra.mxu0 %v137
    %223 = vmatpush.xpose.msra.mxu0 %v131
    %224 = vmatpush.xpose.msra.mxu0 %v125
    %225 = vmatpush.xpose.msra.mxu0 %v119
    %226 = vmatpush.xpose.msra.mxu0 %v113
    %227 = vmatpush.xpose.msra.mxu0 %v107
    %228 = vmatpush.xpose.msra.mxu0 %v101
    %229 = vmatpush.xpose.msra.mxu0 %v95
    %230 = vmatmul.f32.gmra.mxu0 %v89
    %v231 = vpop.f32.mrf.mxu0
    %v232 = vadd.f32 %v212, %v231
    %233 = vdwg.mxu0
    %234 = vmatpush.xpose.msra.mxu0 %v186
    %235 = vmatpush.xpose.msra.mxu0 %v180
    %236 = vmatpush.xpose.msra.mxu0 %v174
    %237 = vmatpush.xpose.msra.mxu0 %v168
    %238 = vmatpush.xpose.msra.mxu0 %v162
    %239 = vmatpush.xpose.msra.mxu0 %v156
    %240 = vmatpush.xpose.msra.mxu0 %v150
    %241 = vmatpush.xpose.msra.mxu0 %v144
    %242 = vmatpush.xpose.msra.mxu0 %v138
    %243 = vmatpush.xpose.msra.mxu0 %v132
    %244 = vmatpush.xpose.msra.mxu0 %v126
    %245 = vmatpush.xpose.msra.mxu0 %v120
    %246 = vmatpush.xpose.msra.mxu0 %v114
    %247 = vmatpush.xpose.msra.mxu0 %v108
    %248 = vmatpush.xpose.msra.mxu0 %v102
    %249 = vmatpush.xpose.msra.mxu0 %v96
    %250 = vmatmul.f32.gmra.mxu0 %v90
    %v251 = vpop.f32.mrf.mxu0
    %v252 = vadd.f32 %v232, %v251
    %253 = vdwg.mxu0
    %254 = vmatpush.xpose.msra.mxu0 %v187
    %255 = vmatpush.xpose.msra.mxu0 %v181
    %256 = vmatpush.xpose.msra.mxu0 %v175
    %257 = vmatpush.xpose.msra.mxu0 %v169
    %258 = vmatpush.xpose.msra.mxu0 %v163
    %259 = vmatpush.xpose.msra.mxu0 %v157
    %260 = vmatpush.xpose.msra.mxu0 %v151
    %261 = vmatpush.xpose.msra.mxu0 %v145
    %262 = vmatpush.xpose.msra.mxu0 %v139
    %263 = vmatpush.xpose.msra.mxu0 %v133
    %264 = vmatpush.xpose.msra.mxu0 %v127
    %265 = vmatpush.xpose.msra.mxu0 %v121
    %266 = vmatpush.xpose.msra.mxu0 %v115
    %267 = vmatpush.xpose.msra.mxu0 %v109
    %268 = vmatpush.xpose.msra.mxu0 %v103
    %269 = vmatpush.xpose.msra.mxu0 %v97
    %270 = vmatmul.f32.gmra.mxu0 %v91
    %v271 = vpop.f32.mrf.mxu0
    %v272 = vadd.f32 %v252, %v271
    %273 = vdwg.mxu0
    %274 = vmatpush.xpose.msra.mxu0 %v188
    %275 = vmatpush.xpose.msra.mxu0 %v182
    %276 = vmatpush.xpose.msra.mxu0 %v176
    %277 = vmatpush.xpose.msra.mxu0 %v170
    %278 = vmatpush.xpose.msra.mxu0 %v164
    %279 = vmatpush.xpose.msra.mxu0 %v158
    %280 = vmatpush.xpose.msra.mxu0 %v152
    %281 = vmatpush.xpose.msra.mxu0 %v146
    %282 = vmatpush.xpose.msra.mxu0 %v140
    %283 = vmatpush.xpose.msra.mxu0 %v134
    %284 = vmatpush.xpose.msra.mxu0 %v128
    %285 = vmatpush.xpose.msra.mxu0 %v122
    %286 = vmatpush.xpose.msra.mxu0 %v116
    %287 = vmatpush.xpose.msra.mxu0 %v110
    %288 = vmatpush.xpose.msra.mxu0 %v104
    %289 = vmatpush.xpose.msra.mxu0 %v98
    %290 = vmatmul.f32.gmra.mxu0 %v92
    %v291 = vpop.f32.mrf.mxu0
    %v292 = vadd.f32 %v272, %v291
    %293 = vdwg.mxu0
    %294 = vmatpush.xpose.msra.mxu0 %v189
    %295 = vmatpush.xpose.msra.mxu0 %v183
    %296 = vmatpush.xpose.msra.mxu0 %v177
    %297 = vmatpush.xpose.msra.mxu0 %v171
    %298 = vmatpush.xpose.msra.mxu0 %v165
    %299 = vmatpush.xpose.msra.mxu0 %v159
    %300 = vmatpush.xpose.msra.mxu0 %v153
    %301 = vmatpush.xpose.msra.mxu0 %v147
    %302 = vmatpush.xpose.msra.mxu0 %v141
    %303 = vmatpush.xpose.msra.mxu0 %v135
    %304 = vmatpush.xpose.msra.mxu0 %v129
    %305 = vmatpush.xpose.msra.mxu0 %v123
    %306 = vmatpush.xpose.msra.mxu0 %v117
    %307 = vmatpush.xpose.msra.mxu0 %v111
    %308 = vmatpush.xpose.msra.mxu0 %v105
    %309 = vmatpush.xpose.msra.mxu0 %v99
    %310 = vmatmul.f32.gmra.mxu0 %v93
    %v311 = vpop.f32.mrf.mxu0
    %v312 = vadd.f32 %v292, %v311
    %313 = vdwg.mxu0
    %v314 = vmax.f32 %v312, 0.0
    %v315 = vld [vmem:[#allocation7] sm:$0xff]
    %v316 = vld [vmem:[#allocation7 + $0x8] sm:$0xff]
    %v317 = vld [vmem:[#allocation7 + $0x10] sm:$0xff]
    %v318 = vld [vmem:[#allocation7 + $0x18] sm:$0xff]
    %v319 = vld [vmem:[#allocation7 + $0x20] sm:$0xff]
    %v320 = vld [vmem:[#allocation7 + $0x28] sm:$0xff]
    %v321 = vld [vmem:[#allocation7 + $0x30] sm:$0xff]
    %v322 = vld [vmem:[#allocation7 + $0x38] sm:$0xff]
    %v323 = vld [vmem:[#allocation7 + $0x40] sm:$0xff]
    %v324 = vld [vmem:[#allocation7 + $0x48] sm:$0xff]
    %v325 = vld [vmem:[#allocation7 + $0x50] sm:$0xff]
    %v326 = vld [vmem:[#allocation7 + $0x58] sm:$0xff]
    %v327 = vld [vmem:[#allocation7 + $0x60] sm:$0xff]
    %v328 = vld [vmem:[#allocation7 + $0x68] sm:$0xff]
    %v329 = vld [vmem:[#allocation7 + $0x70] sm:$0xff]
    %v330 = vld [vmem:[#allocation7 + $0x78] sm:$0xff]
    %v331 = vld [vmem:[%s4] sm:$0x1]
    %v333 = vperm.slane %v331, 0
    %335 = vmatpush.msra.mxu0 %v330
    %336 = vmatpush.msra.mxu0 %v329
    %337 = vmatpush.msra.mxu0 %v328
    %338 = vmatpush.msra.mxu0 %v327
    %339 = vmatpush.msra.mxu0 %v326
    %340 = vmatpush.msra.mxu0 %v325
    %341 = vmatpush.msra.mxu0 %v324
    %342 = vmatpush.msra.mxu0 %v323
    %343 = vmatpush.msra.mxu0 %v322
    %344 = vmatpush.msra.mxu0 %v321
    %345 = vmatpush.msra.mxu0 %v320
    %346 = vmatpush.msra.mxu0 %v319
    %347 = vmatpush.msra.mxu0 %v318
    %348 = vmatpush.msra.mxu0 %v317
    %349 = vmatpush.msra.mxu0 %v316
    %350 = vmatpush.msra.mxu0 %v315
    %351 = vmatmul.f32.gmra.mxu0 %v314
    %v352 = vpop.f32.mrf.mxu0
    %v353 = vadd.f32 %v333, %v352
    %354 = vdwg.mxu0
    %v355 = vmax.f32 %v353, 0.0
    %v356 = vld [vmem:[#allocation8] sm:$0xff]
    %v357 = vld [vmem:[#allocation8 + $0x8] sm:$0xff]
    %v358 = vld [vmem:[#allocation8 + $0x10] sm:$0xff]
    %v359 = vld [vmem:[#allocation8 + $0x18] sm:$0xff]
    %v360 = vld [vmem:[#allocation8 + $0x20] sm:$0xff]
    %v361 = vld [vmem:[#allocation8 + $0x28] sm:$0xff]
    %v362 = vld [vmem:[#allocation8 + $0x30] sm:$0xff]
    %v363 = vld [vmem:[#allocation8 + $0x38] sm:$0xff]
    %v364 = vld [vmem:[#allocation8 + $0x40] sm:$0xff]
    %v365 = vld [vmem:[#allocation8 + $0x48] sm:$0xff]
    %v366 = vld [vmem:[#allocation8 + $0x50] sm:$0xff]
    %v367 = vld [vmem:[#allocation8 + $0x58] sm:$0xff]
    %v368 = vld [vmem:[#allocation8 + $0x60] sm:$0xff]
    %v369 = vld [vmem:[#allocation8 + $0x68] sm:$0xff]
    %v370 = vld [vmem:[#allocation8 + $0x70] sm:$0xff]
    %v371 = vld [vmem:[#allocation8 + $0x78] sm:$0xff]
    %v372 = vld [vmem:[%s6] sm:$0x1]
    %v374 = vperm.slane %v372, 0
    %376 = vmatpush.msra.mxu0 %v371
    %377 = vmatpush.msra.mxu0 %v370
    %378 = vmatpush.msra.mxu0 %v369
    %379 = vmatpush.msra.mxu0 %v368
    %380 = vmatpush.msra.mxu0 %v367
    %381 = vmatpush.msra.mxu0 %v366
    %382 = vmatpush.msra.mxu0 %v365
    %383 = vmatpush.msra.mxu0 %v364
    %384 = vmatpush.msra.mxu0 %v363
    %385 = vmatpush.msra.mxu0 %v362
    %386 = vmatpush.msra.mxu0 %v361
    %387 = vmatpush.msra.mxu0 %v360
    %388 = vmatpush.msra.mxu0 %v359
    %389 = vmatpush.msra.mxu0 %v358
    %390 = vmatpush.msra.mxu0 %v357
    %391 = vmatpush.msra.mxu0 %v356
    %392 = vmatmul.f32.gmra.mxu0 %v355
    %v393 = vpop.f32.mrf.mxu0
    %v394 = vadd.f32 %v374, %v393
    %395 = vdwg.mxu0
    %396 = vst [vmem:[#allocation10] sm:$0xff] %v394
    // Predicated region
    $region46: #{tpu_custom_call.1} parent=1 // pred_check
      _
    $region47: #{tpu_custom_call.1} parent=1 // pred_check_branch
      %398 = sbr.rel (0) target = $region49
    $region48: #{tpu_custom_call.1} parent=1 // pred_region
      %400 = vsyncadd [#allocation4], 0
      %s402 = sshll.u32 [#allocation10], 4
      %s403 = int_to_ptr.vmem [resolvable:$true] %s402
      %s404 = sshll.u32 %s7, 4
      %s405 = int_to_ptr.hbm [resolvable:$true] %s404
      %407 = dma.vmem_to_hbm [thread:$0]  %s403, 128, %s405, [#allocation4]
    $region49: #{tpu_custom_call.1} parent=1 // pred_fallthru
      _
    // Predicated region
    $region50: #{tpu_custom_call.1} parent=1 // pred_check
      _
    $region51: #{tpu_custom_call.1} parent=1 // pred_check_branch
      %409 = sbr.rel (0) target = $region53
    $region52: #{tpu_custom_call.1} parent=1 // pred_region
      %411 = dma.done [#allocation4], 128
    $region53: #{tpu_custom_call.1} parent=1 // pred_fallthru
      _
    %412 = vsyncpa [#allocation3], 1
    %413 = vsyncpa [#allocation6], 1
    %414 = vsyncpa [#allocation9], 1
    %415 = vsyncpa [#allocation4], 1

</llo_original>
